<compile_context>
chip_gen: v5e
topology: v5e:2x2
jax: 0.10.0
libtpu: 0.0.40
codegen_flags: <defaults>
</compile_context>

<pallas_src>
import functools

import jax
import jax.numpy as jnp
from jax import lax
from jax.experimental import pallas as pl
from jax.experimental.pallas import tpu as pltpu


def _round_up(x, m):
    return ((x + m - 1) // m) * m


def labert_head_kernel(feat_ref, mask_ref, rhs_ref, pred_ref):
    # feat_ref: (Bb*L, H)     bf16   token features (flattened batch block)
    # mask_ref: (Bb, L, 1)    int32  attention mask
    # rhs_ref : (H, 2*Cblk)   bf16   per-class-block [tag | class_weight] RHS
    # pred_ref: (Bb, Cblk)    f32    output block (lane-dense)
    Bb, L, _ = mask_ref.shape
    Cblk = rhs_ref.shape[1] // 2

    # Single fused MXU matmul: canonical [M, K] x [K, N], bf16 in / f32 acc.
    #   sg[:, :Cblk]  = <feat[b,l,:], tag[c,:]>          (attention scores)
    #   sg[:, Cblk:]  = <feat[b,l,:], class_weight[c,:]> (hidden reduction,
    #                    class-weight scaling fused into the matmul)
    sg = lax.dot_general(
        feat_ref[...], rhs_ref[...], (((1,), (0,)), ((), ())),
        preferred_element_type=jnp.float32)              # [Bb*L, 2*Cblk]

    scores = sg[:, :Cblk].reshape(Bb, L, Cblk)           # [Bb, L, Cblk]
    g = sg[:, Cblk:].reshape(Bb, L, Cblk)                # [Bb, L, Cblk]

    # Masked softmax over tokens (axis=1): additive finite bias on the tiny
    # [Bb, L, 1] mask (broadcast add, no full-size select; robust to fully
    # masked / padded rows), max-subtracted, normalization deferred to one EUP
    # reciprocal on the [Bb, Cblk] denominator.
    bias = jnp.where(mask_ref[...] > 0,
                     jnp.float32(0.0), jnp.float32(-1e30))  # [Bb, L, 1]
    masked = scores + bias
    m = jnp.max(masked, axis=1, keepdims=True)           # [Bb, 1, Cblk]
    p = jnp.exp(masked - m)                              # unnormalized, f32
    denom = jnp.sum(p, axis=1)                           # [Bb, Cblk]

    # pred[b,c] = (sum_l p * g) / denom
    num = jnp.sum(p * g, axis=1)                         # [Bb, Cblk]
    pred_ref[...] = num * pl.reciprocal(denom, approx=True)


@functools.partial(jax.jit, static_argnames=("block_b", "class_block",
                                              "vmem_limit_bytes"))
def labert_head(token_feat, attention_mask, tag_embedding, class_weight,
                *, block_b=8, class_block=256, vmem_limit_bytes=None):
    B, L, H = token_feat.shape
    C = tag_embedding.shape[0]

    LANE, SUBLANE = 128, 8

    # ---- tile sizes -------------------------------------------------------
    # Class block: lane-dense multiple of 128, never larger than needed.
    Cblk = max(LANE, (class_block // LANE) * LANE)
    Cblk = min(Cblk, _round_up(C, LANE))
    C_pad = _round_up(C, Cblk)
    num_c_blocks = C_pad // Cblk

    # Batch block: sublane multiple; avoid gratuitous padding at tiny B.
    Bb = max(SUBLANE, (block_b // SUBLANE) * SUBLANE)
    Bb = min(Bb, _round_up(B, SUBLANE))
    B_pad = _round_up(B, Bb)
    num_b_blocks = B_pad // Bb

    # Sequence padded to a sublane multiple so reshape(Bb, L, Cblk) of the
    # [Bb*L, 2*Cblk] matmul output is a free sublane split.
    L_pad = _round_up(L, SUBLANE)

    # ---- operand prep (XLA side, cheap layout plumbing) --------------------
    feat = token_feat.astype(jnp.bfloat16)
    mask = attention_mask.astype(jnp.int32).reshape(B, L, 1)
    if B_pad != B or L_pad != L:
        feat = jnp.pad(feat, ((0, B_pad - B), (0, L_pad - L), (0, 0)))
        mask = jnp.pad(mask, ((0, B_pad - B), (0, L_pad - L), (0, 0)))
    feat_flat = feat.reshape(B_pad * L_pad, H)

    tag = tag_embedding.astype(jnp.bfloat16)
    cw = class_weight.astype(jnp.bfloat16)
    if C_pad != C:
        tag = jnp.pad(tag, ((0, C_pad - C), (0, 0)))
        cw = jnp.pad(cw, ((0, C_pad - C), (0, 0)))
    # Pre-transpose to [H, C_pad] (K on sublanes, N on lanes) and interleave
    # per class block: block j's columns are [tag block j | cw block j], so
    # each grid step reads one contiguous [H, 2*Cblk] tile.
    tag_t = tag.T.reshape(H, num_c_blocks, Cblk)
    cw_t = cw.T.reshape(H, num_c_blocks, Cblk)
    rhs = jnp.concatenate([tag_t, cw_t], axis=2).reshape(
        H, num_c_blocks * 2 * Cblk)

    # ---- VMEM budget & cost estimate ---------------------------------------
    if vmem_limit_bytes is None:
        feat_tile = Bb * L_pad * H * 2          # bf16
        rhs_tile = H * 2 * Cblk * 2             # bf16
        mask_tile = Bb * L_pad * 4
        out_tile = Bb * Cblk * 4
        # sg (2 widths) + p + g worth of live f32 intermediates, generous.
        interm = 4 * Bb * L_pad * Cblk * 4
        vmem_limit_bytes = min(
            128 << 20,
            max(32 << 20,
                2 * (feat_tile + rhs_tile + mask_tile + out_tile)
                + interm + (4 << 20)))

    cost = pl.CostEstimate(
        flops=4 * B_pad * L_pad * H * C_pad,          # one fused 2*M*K*(2N)
        transcendentals=B_pad * L_pad * C_pad,        # exp
        bytes_accessed=(B_pad * L_pad * H * 2         # feat (read once)
                        + num_b_blocks * H * 2 * C_pad * 2  # rhs per b-block
                        + B_pad * L_pad * 4           # mask
                        + B_pad * C_pad * 4))         # output

    out = pl.pallas_call(
        labert_head_kernel,
        out_shape=jax.ShapeDtypeStruct((B_pad, C_pad), jnp.float32),
        grid_spec=pltpu.PrefetchScalarGridSpec(
            num_scalar_prefetch=0,
            grid=(num_b_blocks, num_c_blocks),
            in_specs=[
                # feat: invariant along the (inner) class axis -> fetched once
                # per batch block, not re-DMA'd across class blocks.
                pl.BlockSpec((Bb * L_pad, H), lambda b, j: (b, 0)),
                pl.BlockSpec((Bb, L_pad, 1), lambda b, j: (b, 0, 0)),
                pl.BlockSpec((H, 2 * Cblk), lambda b, j: (0, j)),
            ],
            out_specs=pl.BlockSpec((Bb, Cblk), lambda b, j: (b, j)),
        ),
        compiler_params=pltpu.CompilerParams(
            dimension_semantics=("parallel", "parallel"),
            vmem_limit_bytes=int(vmem_limit_bytes)),
        cost_estimate=cost,
    )(feat_flat, mask, rhs)

    return out[:B, :C]


if __name__ == "__main__":
    # Small, BERT-consistent shapes (hidden scaled down from 768 -> 32).
    B, L, H = 2, 8, 32        # batch, seq len, hidden
    C, T = 4, 3               # num_classes, tag tokens per class
    vocab = 50

    key = jax.random.PRNGKey(0)
    k_word, k_tt, k_pos, k_cw, k_ids, k_tag = jax.random.split(key, 6)

    word_emb = jax.random.normal(k_word, (vocab, H), jnp.float32) * 0.02
    tt_emb = jax.random.normal(k_tt, (2, H), jnp.float32) * 0.02
    pos_emb = jax.random.normal(k_pos, (L, H), jnp.float32) * 0.02
    class_weight = jax.random.uniform(k_cw, (C, H), jnp.float32, 0.0, 1.0)

    ids = jax.random.randint(k_ids, (B, L), 0, vocab)
    token_type_ids = jnp.zeros((B, L), jnp.int32)
    attention_mask = jnp.array(
        [[1] * L, [1] * 5 + [0] * (L - 5)], dtype=jnp.int32)
    encoded_tag = jax.random.randint(k_tag, (C, T), 0, vocab)
    tag_mask = jnp.array([[1, 1, 1],
                          [1, 1, 0],
                          [1, 1, 1],
                          [1, 0, 0]], dtype=jnp.float32)

    # TODO(synk): a full pretrained BERT encoder is not reimplemented here; the
    # stand-in is BERT's embedding layer (word + token-type + position +
    # LayerNorm) producing token_feat. This is plain-JAX glue, not the hot path.
    emb = word_emb[ids] + tt_emb[token_type_ids] + pos_emb[None, :, :]
    mu = emb.mean(-1, keepdims=True)
    var = emb.var(-1, keepdims=True)
    token_feat = (emb - mu) / jnp.sqrt(var + 1e-12)               # [B, L, H]

    # tag_embedding: embed(encoded_tag), masked mean over tag tokens.
    tag_e = word_emb[encoded_tag]                                  # [C, T, H]
    tag_embedding = (jnp.sum(tag_e * tag_mask[..., None], axis=1)
                     / jnp.sum(tag_mask, axis=1, keepdims=True))   # [C, H]

    # Pallas kernel: the label-attention head hot path.
    pred = labert_head(token_feat, attention_mask, tag_embedding, class_weight)
    pred = jax.block_until_ready(pred)

    # Pure-JAX f32 reference of the same head (module semantics).
    scores = jnp.einsum("blh,ch->bcl", token_feat, tag_embedding)
    masked = jnp.where(attention_mask[:, None, :] > 0, scores, -jnp.inf)
    attn = jax.nn.softmax(masked, axis=-1)
    attn_out = jnp.einsum("bcl,blh->bch", attn, token_feat)
    ref = jnp.sum(attn_out * class_weight[None], axis=-1)

    assert pred.shape == (B, C)
    # Tolerance accounts for bf16 MXU operands + approx reciprocal.
    assert jnp.allclose(pred, ref, atol=3e-2, rtol=3e-2), (pred, ref)

    print("KERNEL_OK")
</pallas_src>

<mosaic_0001>
module attributes {stable_mosaic.version = 11 : i64} {
  func.func @labert_head_kernel(%arg0: i32, %arg1: i32, %arg2: memref<64x32xbf16, #tpu.memory_space<vmem>>, %arg3: memref<8x8x1xi32, #tpu.memory_space<vmem>>, %arg4: memref<32x256xbf16, #tpu.memory_space<vmem>>, %arg5: memref<8x128xf32, #tpu.memory_space<vmem>>) attributes {dimension_semantics = [#tpu.dimension_semantics<parallel>, #tpu.dimension_semantics<parallel>], iteration_bounds = array<i64: 1, 1>, scalar_prefetch = 0 : i64, scratch_operands = 0 : i64, tpu.core_type = #tpu.core_type<tc>, window_params = [{transform_indices = @transform_0, window_bounds = array<i64: 64, 32>}, {transform_indices = @transform_1, window_bounds = array<i64: 8, 8, 1>}, {transform_indices = @transform_2, window_bounds = array<i64: 32, 256>}, {transform_indices = @transform_3, window_bounds = array<i64: 8, 128>}]} {
    %c0 = arith.constant 0 : index
    %c0_0 = arith.constant 0 : index
    %0 = vector.load %arg2[%c0, %c0_0] : memref<64x32xbf16, #tpu.memory_space<vmem>>, vector<64x32xbf16>
    %c0_1 = arith.constant 0 : index
    %c0_2 = arith.constant 0 : index
    %1 = vector.load %arg4[%c0_1, %c0_2] : memref<32x256xbf16, #tpu.memory_space<vmem>>, vector<32x256xbf16>
    %cst = arith.constant dense<0.000000e+00> : vector<64x256xf32>
    %2 = tpu.matmul %0, %1, %cst {dimension_numbers = #tpu.dot_dimension_numbers<[1], [0], [0], [1], [0, 0, 1, 1], [], []>} : vector<64x32xbf16>, vector<32x256xbf16>, vector<64x256xf32> -> vector<64x256xf32>
    %3 = vector.extract_strided_slice %2 {offsets = [0, 0], sizes = [64, 128], strides = [1, 1]} : vector<64x256xf32> to vector<64x128xf32>
    %4 = vector.shape_cast %3 : vector<64x128xf32> to vector<8x8x128xf32>
    %5 = vector.extract_strided_slice %2 {offsets = [0, 128], sizes = [64, 128], strides = [1, 1]} : vector<64x256xf32> to vector<64x128xf32>
    %6 = vector.shape_cast %5 : vector<64x128xf32> to vector<8x8x128xf32>
    %c0_3 = arith.constant 0 : index
    %c0_4 = arith.constant 0 : index
    %c0_5 = arith.constant 0 : index
    %7 = vector.load %arg3[%c0_3, %c0_4, %c0_5] : memref<8x8x1xi32, #tpu.memory_space<vmem>>, vector<8x8x1xi32>
    %c0_i32 = arith.constant 0 : i32
    %8 = vector.broadcast %c0_i32 : i32 to vector<8x8x1xi32>
    %9 = arith.cmpi sgt, %7, %8 : vector<8x8x1xi32>
    %cst_6 = arith.constant 0.000000e+00 : f32
    %cst_7 = arith.constant -1.000000e+30 : f32
    %10 = vector.broadcast %cst_6 : f32 to vector<8x8x1xf32>
    %11 = vector.broadcast %cst_7 : f32 to vector<8x8x1xf32>
    %12 = arith.select %9, %10, %11 : vector<8x8x1xi1>, vector<8x8x1xf32>
    %13 = vector.broadcast %12 : vector<8x8x1xf32> to vector<8x8x128xf32>
    %14 = arith.addf %4, %13 : vector<8x8x128xf32>
    %cst_8 = arith.constant dense<0xFF800000> : vector<8x128xf32>
    %15 = vector.multi_reduction <maximumf>, %14, %cst_8 [1] : vector<8x8x128xf32> to vector<8x128xf32>
    %16 = vector.shape_cast %15 : vector<8x128xf32> to vector<8x1x128xf32>
    %17 = vector.broadcast %16 : vector<8x1x128xf32> to vector<8x8x128xf32>
    %18 = arith.subf %14, %17 : vector<8x8x128xf32>
    %19 = math.exp %18 : vector<8x8x128xf32>
    %cst_9 = arith.constant dense<0.000000e+00> : vector<8x128xf32>
    %20 = vector.multi_reduction <add>, %19, %cst_9 [1] : vector<8x8x128xf32> to vector<8x128xf32>
    %21 = arith.mulf %19, %6 : vector<8x8x128xf32>
    %cst_10 = arith.constant dense<0.000000e+00> : vector<8x128xf32>
    %22 = vector.multi_reduction <add>, %21, %cst_10 [1] : vector<8x8x128xf32> to vector<8x128xf32>
    %23 = tpu.reciprocal %20 {approx = true} : vector<8x128xf32> -> vector<8x128xf32>
    %24 = arith.mulf %22, %23 : vector<8x128xf32>
    %c0_11 = arith.constant 0 : index
    %c0_12 = arith.constant 0 : index
    %25 = vector.load %arg5[%c0_11, %c0_12] : memref<8x128xf32, #tpu.memory_space<vmem>>, vector<8x128xf32>
    tpu.vector_store %arg5[%c0_11, %c0_12], %24 {strides = array<i32>} : memref<8x128xf32, #tpu.memory_space<vmem>>, vector<8x128xf32>,
    return
  }
  func.func @transform_0(%arg0: i32, %arg1: i32) -> (i32, i32) {
    %c0_i32 = arith.constant 0 : i32
    %c0_i32_0 = arith.constant 0 : i32
    return %arg0, %c0_i32 : i32, i32
  }
  func.func @transform_1(%arg0: i32, %arg1: i32) -> (i32, i32, i32) {
    %c0_i32 = arith.constant 0 : i32
    %c0_i32_0 = arith.constant 0 : i32
    %c0_i32_1 = arith.constant 0 : i32
    return %arg0, %c0_i32, %c0_i32_0 : i32, i32, i32
  }
  func.func @transform_2(%arg0: i32, %arg1: i32) -> (i32, i32) {
    %c0_i32 = arith.constant 0 : i32
    %c0_i32_0 = arith.constant 0 : i32
    return %c0_i32, %arg1 : i32, i32
  }
  func.func @transform_3(%arg0: i32, %arg1: i32) -> (i32, i32) {
    %c0_i32 = arith.constant 0 : i32
    return %arg0, %arg1 : i32, i32
  }
}

</mosaic_0001>

<llo_original>
// kernel: labert_head.1
$region0: #{labert_head.1}
  #allocation0 [shape = 'u32[]', space=smem, size = 0x4, offset = 0x4, fixed_abs, tag = 'smem constant byte address 0x4 - core index']
  #allocation1 [shape = 'u32[72,128]{1,0:T(1,128)}', space=vmem, size = 0x9000, scoped, tag = 'internal scratch']
  %s0 = inlined_call_operand.vmem [shape: bf16[64,32], index: 0, kind: input, shape index: {}]
  %s1 = inlined_call_operand.vmem [shape: s32[8,8,1], index: 1, kind: input, shape index: {}]
  %s2 = inlined_call_operand.vmem [shape: bf16[32,256], index: 2, kind: input, shape index: {}]
  %s3 = inlined_call_operand.vmem [shape: f32[8,128], index: 3, kind: output, shape index: {}]
  %s4 = sld [smem:[#allocation0]]
  $region22: #{labert_head.1} parent=0
    _
  %s6 = ssub.s32 1, %s4
  %s7 = scalar_select 0, %s6, %s4
  // Predicated region
  $region2: #{labert_head.1} parent=0 // pred_check
    _
  $region3: #{labert_head.1} parent=0 // pred_check_branch
    %9 = sbr.rel (0) target = $region5
  $region4: #{labert_head.1} parent=0 // pred_region
    _
  $region5: #{labert_head.1} parent=0 // pred_fallthru
    _
  // Predicated region
  $region6: #{labert_head.1} parent=0 // pred_check
    _
  $region7: #{labert_head.1} parent=0 // pred_check_branch
    %11 = sbr.rel (0) target = $region9
  $region8: #{labert_head.1} parent=0 // pred_region
    _
  $region9: #{labert_head.1} parent=0 // pred_fallthru
    _
  // Predicated region
  $region10: #{labert_head.1} parent=0 // pred_check
    _
  $region11: #{labert_head.1} parent=0 // pred_check_branch
    %13 = sbr.rel (0) target = $region13
  $region12: #{labert_head.1} parent=0 // pred_region
    _
  $region13: #{labert_head.1} parent=0 // pred_fallthru
    _
  %v15 = vld [vmem:[%s0] sm:$0xf]
  %v16 = vld [vmem:[%s0 + $0x4] sm:$0xf]
  %v17 = vld [vmem:[%s0 + $0x8] sm:$0xf]
  %v18 = vld [vmem:[%s0 + $0xc] sm:$0xf]
  %v19 = vld [vmem:[%s0 + $0x10] sm:$0xf]
  %v20 = vld [vmem:[%s0 + $0x14] sm:$0xf]
  %v21 = vld [vmem:[%s0 + $0x18] sm:$0xf]
  %v22 = vld [vmem:[%s0 + $0x1c] sm:$0xf]
  %v23 = vld [vmem:[%s2] sm:$0xff]
  %v24 = vld [vmem:[%s2 + $0x8] sm:$0xff]
  %v25 = vld [vmem:[%s2 + $0x10] sm:$0xff]
  %v26 = vld [vmem:[%s2 + $0x18] sm:$0xff]
  %v35 = vunpack.c.l.b16 %v15
  %v36 = vunpack.c.l.b16 %v16
  %v37 = vunpack.c.l.b16 %v17
  %v38 = vunpack.c.l.b16 %v18
  %v39 = vunpack.c.l.b16 %v19
  %v40 = vunpack.c.l.b16 %v20
  %v41 = vunpack.c.l.b16 %v21
  %v42 = vunpack.c.l.b16 %v22
  %v43 = vpack.c.b16 %v36, %v35
  %v44 = vpack.c.b16 %v38, %v37
  %v45 = vpack.c.b16 %v40, %v39
  %v46 = vpack.c.b16 %v42, %v41
  %v51 = vunpack.c.l.b16 %v23
  %v52 = vunpack.c.h.b16 %v23
  %v53 = vunpack.c.l.b16 %v24
  %v54 = vunpack.c.h.b16 %v24
  %v55 = vunpack.c.l.b16 %v25
  %v56 = vunpack.c.h.b16 %v25
  %v57 = vunpack.c.l.b16 %v26
  %v58 = vunpack.c.h.b16 %v26
  %v59 = vpack.c.b16 %v53, %v51
  %v60 = vpack.c.b16 %v54, %v52
  %v61 = vpack.c.b16 %v57, %v55
  %v62 = vpack.c.b16 %v58, %v56
  %vm67 = vcmask 261120
  %v69 = vsel %vm67, %v43, 0
  %v72 = vsel %vm67, %v44, 0
  %v75 = vsel %vm67, %v45, 0
  %v78 = vsel %vm67, %v46, 0
  %80 = vmatpush.bf16.msra.mxu0 0
  %81 = vmatpush.bf16.msra.mxu0 0
  %82 = vmatpush.bf16.msra.mxu0 0
  %83 = vmatpush.bf16.msra.mxu0 0
  %84 = vmatpush.bf16.msra.mxu0 0
  %85 = vmatpush.bf16.msra.mxu0 0
  %86 = vmatpush.bf16.msra.mxu0 %v61
  %87 = vmatpush.bf16.msra.mxu0 %v59
  %88 = vmatmul.bf16.gmra.mxu0 %v69
  %v89 = vpop.f32.mrf.mxu0
  %v90 = vadd.f32 0.0, %v89
  %v91 = vpop.f32.mrf.mxu0
  %v92 = vadd.f32 0.0, %v91
  %93 = vmatmul.bf16.gmra.mxu0 %v72
  %v94 = vpop.f32.mrf.mxu0
  %v95 = vadd.f32 0.0, %v94
  %v96 = vpop.f32.mrf.mxu0
  %v97 = vadd.f32 0.0, %v96
  %98 = vmatmul.bf16.gmra.mxu0 %v75
  %v99 = vpop.f32.mrf.mxu0
  %v100 = vadd.f32 0.0, %v99
  %v101 = vpop.f32.mrf.mxu0
  %v102 = vadd.f32 0.0, %v101
  %103 = vmatmul.bf16.gmra.mxu0 %v78
  %v104 = vpop.f32.mrf.mxu0
  %v105 = vadd.f32 0.0, %v104
  %v106 = vpop.f32.mrf.mxu0
  %v107 = vadd.f32 0.0, %v106
  %108 = vdwg.mxu0
  %109 = vmatpush.bf16.msra.mxu0 0
  %110 = vmatpush.bf16.msra.mxu0 0
  %111 = vmatpush.bf16.msra.mxu0 0
  %112 = vmatpush.bf16.msra.mxu0 0
  %113 = vmatpush.bf16.msra.mxu0 0
  %114 = vmatpush.bf16.msra.mxu0 0
  %115 = vmatpush.bf16.msra.mxu0 %v62
  %116 = vmatpush.bf16.msra.mxu0 %v60
  %117 = vmatmul.bf16.gmra.mxu0 %v69
  %v118 = vpop.f32.mrf.mxu0
  %v119 = vadd.f32 0.0, %v118
  %v120 = vpop.f32.mrf.mxu0
  %v121 = vadd.f32 0.0, %v120
  %122 = vmatmul.bf16.gmra.mxu0 %v72
  %v123 = vpop.f32.mrf.mxu0
  %v124 = vadd.f32 0.0, %v123
  %v125 = vpop.f32.mrf.mxu0
  %v126 = vadd.f32 0.0, %v125
  %127 = vmatmul.bf16.gmra.mxu0 %v75
  %v128 = vpop.f32.mrf.mxu0
  %v129 = vadd.f32 0.0, %v128
  %v130 = vpop.f32.mrf.mxu0
  %v131 = vadd.f32 0.0, %v130
  %132 = vmatmul.bf16.gmra.mxu0 %v78
  %v133 = vpop.f32.mrf.mxu0
  %v134 = vadd.f32 0.0, %v133
  %v135 = vpop.f32.mrf.mxu0
  %v136 = vadd.f32 0.0, %v135
  %137 = vdwg.mxu0
  %v138 = vld [vmem:[%s1] sm:$0xff]
  %v139 = vld [vmem:[%s1 + $0x8] sm:$0xff]
  %v140 = vld [vmem:[%s1 + $0x10] sm:$0xff]
  %v141 = vld [vmem:[%s1 + $0x18] sm:$0xff]
  %v142 = vld [vmem:[%s1 + $0x20] sm:$0xff]
  %v143 = vld [vmem:[%s1 + $0x28] sm:$0xff]
  %v144 = vld [vmem:[%s1 + $0x30] sm:$0xff]
  %v145 = vld [vmem:[%s1 + $0x38] sm:$0xff]
  %vm146 = vcmp.gt.s32.totalorder %v138, 0
  %vm147 = vcmp.gt.s32.totalorder %v139, 0
  %vm148 = vcmp.gt.s32.totalorder %v140, 0
  %vm149 = vcmp.gt.s32.totalorder %v141, 0
  %vm150 = vcmp.gt.s32.totalorder %v142, 0
  %vm151 = vcmp.gt.s32.totalorder %v143, 0
  %vm152 = vcmp.gt.s32.totalorder %v144, 0
  %vm153 = vcmp.gt.s32.totalorder %v145, 0
  %v154 = vsel %vm146, 0.0, -1e+30
  %v155 = vsel %vm147, 0.0, -1e+30
  %v156 = vsel %vm148, 0.0, -1e+30
  %v157 = vsel %vm149, 0.0, -1e+30
  %v158 = vsel %vm150, 0.0, -1e+30
  %v159 = vsel %vm151, 0.0, -1e+30
  %v160 = vsel %vm152, 0.0, -1e+30
  %v161 = vsel %vm153, 0.0, -1e+30
  %163 = vset.pattern.permute.xlu0 0
  %164 = vperm.xlu0 %163, %v154
  %v165 = vpop.permute.xlu0 %164
  %168 = vset.pattern.permute.xlu0 0
  %169 = vperm.xlu0 %168, %v155
  %v170 = vpop.permute.xlu0 %169
  %173 = vset.pattern.permute.xlu0 0
  %174 = vperm.xlu0 %173, %v156
  %v175 = vpop.permute.xlu0 %174
  %178 = vset.pattern.permute.xlu0 0
  %179 = vperm.xlu0 %178, %v157
  %v180 = vpop.permute.xlu0 %179
  %183 = vset.pattern.permute.xlu0 0
  %184 = vperm.xlu0 %183, %v158
  %v185 = vpop.permute.xlu0 %184
  %188 = vset.pattern.permute.xlu0 0
  %189 = vperm.xlu0 %188, %v159
  %v190 = vpop.permute.xlu0 %189
  %193 = vset.pattern.permute.xlu0 0
  %194 = vperm.xlu0 %193, %v160
  %v195 = vpop.permute.xlu0 %194
  %198 = vset.pattern.permute.xlu0 0
  %199 = vperm.xlu0 %198, %v161
  %v200 = vpop.permute.xlu0 %199
  %v202 = vadd.f32 %v90, %v165
  %v203 = vadd.f32 %v92, %v170
  %v204 = vadd.f32 %v95, %v175
  %v205 = vadd.f32 %v97, %v180
  %v206 = vadd.f32 %v100, %v185
  %v207 = vadd.f32 %v102, %v190
  %v208 = vadd.f32 %v105, %v195
  %v209 = vadd.f32 %v107, %v200
  %v210 = vrot.slane %v202, 4
  %v211 = vmax.f32 %v202, %v210
  %v212 = vrot.slane %v211, 2
  %v213 = vmax.f32 %v211, %v212
  %v214 = vrot.slane %v213, 1
  %v215 = vmax.f32 %v213, %v214
  %v216 = vrot.slane %v203, 4
  %v217 = vmax.f32 %v203, %v216
  %v218 = vrot.slane %v217, 2
  %v219 = vmax.f32 %v217, %v218
  %v220 = vrot.slane %v219, 1
  %v221 = vmax.f32 %v219, %v220
  %v222 = vrot.slane %v204, 4
  %v223 = vmax.f32 %v204, %v222
  %v224 = vrot.slane %v223, 2
  %v225 = vmax.f32 %v223, %v224
  %v226 = vrot.slane %v225, 1
  %v227 = vmax.f32 %v225, %v226
  %v228 = vrot.slane %v205, 4
  %v229 = vmax.f32 %v205, %v228
  %v230 = vrot.slane %v229, 2
  %v231 = vmax.f32 %v229, %v230
  %v232 = vrot.slane %v231, 1
  %v233 = vmax.f32 %v231, %v232
  %v234 = vrot.slane %v206, 4
  %v235 = vmax.f32 %v206, %v234
  %v236 = vrot.slane %v235, 2
  %v237 = vmax.f32 %v235, %v236
  %v238 = vrot.slane %v237, 1
  %v239 = vmax.f32 %v237, %v238
  %v240 = vrot.slane %v207, 4
  %v241 = vmax.f32 %v207, %v240
  %v242 = vrot.slane %v241, 2
  %v243 = vmax.f32 %v241, %v242
  %v244 = vrot.slane %v243, 1
  %v245 = vmax.f32 %v243, %v244
  %v246 = vrot.slane %v208, 4
  %v247 = vmax.f32 %v208, %v246
  %v248 = vrot.slane %v247, 2
  %v249 = vmax.f32 %v247, %v248
  %v250 = vrot.slane %v249, 1
  %v251 = vmax.f32 %v249, %v250
  %v252 = vrot.slane %v209, 4
  %v253 = vmax.f32 %v209, %v252
  %v254 = vrot.slane %v253, 2
  %v255 = vmax.f32 %v253, %v254
  %v256 = vrot.slane %v255, 1
  %v257 = vmax.f32 %v255, %v256
  %v258 = vsub.f32 %v202, %v215
  %v259 = vsub.f32 %v203, %v221
  %v260 = vsub.f32 %v204, %v227
  %v261 = vsub.f32 %v205, %v233
  %v262 = vsub.f32 %v206, %v239
  %v263 = vsub.f32 %v207, %v245
  %v264 = vsub.f32 %v208, %v251
  %v265 = vsub.f32 %v209, %v257
  %v266 = vmul.f32 %v258, 1.442695
  %v267 = vpow.pop %v266
  %v268 = vmul.f32 %v259, 1.442695
  %v269 = vpow.pop %v268
  %v270 = vmul.f32 %v260, 1.442695
  %v271 = vpow.pop %v270
  %v272 = vmul.f32 %v261, 1.442695
  %v273 = vpow.pop %v272
  %v274 = vmul.f32 %v262, 1.442695
  %v275 = vpow.pop %v274
  %v276 = vmul.f32 %v263, 1.442695
  %v277 = vpow.pop %v276
  %v278 = vmul.f32 %v264, 1.442695
  %v279 = vpow.pop %v278
  %v280 = vmul.f32 %v265, 1.442695
  %v281 = vpow.pop %v280
  %v282 = vrot.slane %v267, 4
  %v283 = vadd.f32 %v267, %v282
  %v284 = vrot.slane %v283, 2
  %v285 = vadd.f32 %v283, %v284
  %v286 = vrot.slane %v285, 1
  %v287 = vadd.f32 %v285, %v286
  %v288 = vrot.slane %v269, 4
  %v289 = vadd.f32 %v269, %v288
  %v290 = vrot.slane %v289, 2
  %v291 = vadd.f32 %v289, %v290
  %v292 = vrot.slane %v291, 1
  %v293 = vadd.f32 %v291, %v292
  %v294 = vrot.slane %v271, 4
  %v295 = vadd.f32 %v271, %v294
  %v296 = vrot.slane %v295, 2
  %v297 = vadd.f32 %v295, %v296
  %v298 = vrot.slane %v297, 1
  %v299 = vadd.f32 %v297, %v298
  %v300 = vrot.slane %v273, 4
  %v301 = vadd.f32 %v273, %v300
  %v302 = vrot.slane %v301, 2
  %v303 = vadd.f32 %v301, %v302
  %v304 = vrot.slane %v303, 1
  %v305 = vadd.f32 %v303, %v304
  %v306 = vrot.slane %v275, 4
  %v307 = vadd.f32 %v275, %v306
  %v308 = vrot.slane %v307, 2
  %v309 = vadd.f32 %v307, %v308
  %v310 = vrot.slane %v309, 1
  %v311 = vadd.f32 %v309, %v310
  %v312 = vrot.slane %v277, 4
  %v313 = vadd.f32 %v277, %v312
  %v314 = vrot.slane %v313, 2
  %v315 = vadd.f32 %v313, %v314
  %v316 = vrot.slane %v315, 1
  %v317 = vadd.f32 %v315, %v316
  %v318 = vrot.slane %v279, 4
  %v319 = vadd.f32 %v279, %v318
  %v320 = vrot.slane %v319, 2
  %v321 = vadd.f32 %v319, %v320
  %v322 = vrot.slane %v321, 1
  %v323 = vadd.f32 %v321, %v322
  %v324 = vrot.slane %v281, 4
  %v325 = vadd.f32 %v281, %v324
  %v326 = vrot.slane %v325, 2
  %v327 = vadd.f32 %v325, %v326
  %v328 = vrot.slane %v327, 1
  %v329 = vadd.f32 %v327, %v328
  %v330 = vmul.f32 %v267, %v119
  %v331 = vmul.f32 %v269, %v121
  %v332 = vmul.f32 %v271, %v124
  %v333 = vmul.f32 %v273, %v126
  %v334 = vmul.f32 %v275, %v129
  %v335 = vmul.f32 %v277, %v131
  %v336 = vmul.f32 %v279, %v134
  %v337 = vmul.f32 %v281, %v136
  %v338 = vrot.slane %v330, 4
  %v339 = vadd.f32 %v330, %v338
  %v340 = vrot.slane %v339, 2
  %v341 = vadd.f32 %v339, %v340
  %v342 = vrot.slane %v341, 1
  %v343 = vadd.f32 %v341, %v342
  %v344 = vrot.slane %v331, 4
  %v345 = vadd.f32 %v331, %v344
  %v346 = vrot.slane %v345, 2
  %v347 = vadd.f32 %v345, %v346
  %v348 = vrot.slane %v347, 1
  %v349 = vadd.f32 %v347, %v348
  %v350 = vrot.slane %v332, 4
  %v351 = vadd.f32 %v332, %v350
  %v352 = vrot.slane %v351, 2
  %v353 = vadd.f32 %v351, %v352
  %v354 = vrot.slane %v353, 1
  %v355 = vadd.f32 %v353, %v354
  %v356 = vrot.slane %v333, 4
  %v357 = vadd.f32 %v333, %v356
  %v358 = vrot.slane %v357, 2
  %v359 = vadd.f32 %v357, %v358
  %v360 = vrot.slane %v359, 1
  %v361 = vadd.f32 %v359, %v360
  %v362 = vrot.slane %v334, 4
  %v363 = vadd.f32 %v334, %v362
  %v364 = vrot.slane %v363, 2
  %v365 = vadd.f32 %v363, %v364
  %v366 = vrot.slane %v365, 1
  %v367 = vadd.f32 %v365, %v366
  %v368 = vrot.slane %v335, 4
  %v369 = vadd.f32 %v335, %v368
  %v370 = vrot.slane %v369, 2
  %v371 = vadd.f32 %v369, %v370
  %v372 = vrot.slane %v371, 1
  %v373 = vadd.f32 %v371, %v372
  %v374 = vrot.slane %v336, 4
  %v375 = vadd.f32 %v336, %v374
  %v376 = vrot.slane %v375, 2
  %v377 = vadd.f32 %v375, %v376
  %v378 = vrot.slane %v377, 1
  %v379 = vadd.f32 %v377, %v378
  %v380 = vrot.slane %v337, 4
  %v381 = vadd.f32 %v337, %v380
  %v382 = vrot.slane %v381, 2
  %v383 = vadd.f32 %v381, %v382
  %v384 = vrot.slane %v383, 1
  %v385 = vadd.f32 %v383, %v384
  %v386 = vrcp.pop %v287
  %v387 = vrcp.pop %v293
  %v388 = vrcp.pop %v299
  %v389 = vrcp.pop %v305
  %v390 = vrcp.pop %v311
  %v391 = vrcp.pop %v317
  %v392 = vrcp.pop %v323
  %v393 = vrcp.pop %v329
  %v394 = vmul.f32 %v343, %v386
  %v395 = vmul.f32 %v349, %v387
  %v396 = vmul.f32 %v355, %v388
  %v397 = vmul.f32 %v361, %v389
  %v398 = vmul.f32 %v367, %v390
  %v399 = vmul.f32 %v373, %v391
  %v400 = vmul.f32 %v379, %v392
  %v401 = vmul.f32 %v385, %v393
  %vm410 = vcmask 1041409
  %v411 = vsel %vm410, %v395, %v394
  %vm412 = vcmask 1042434
  %v413 = vsel %vm412, %v396, %v411
  %vm414 = vcmask 1043459
  %v415 = vsel %vm414, %v397, %v413
  %vm416 = vcmask 1044484
  %v417 = vsel %vm416, %v398, %v415
  %vm418 = vcmask 1045509
  %v419 = vsel %vm418, %v399, %v417
  %vm420 = vcmask 1046534
  %v421 = vsel %vm420, %v400, %v419
  %vm422 = vcmask 1047559
  %v423 = vsel %vm422, %v401, %v421
  %425 = vst [vmem:[%s3] sm:$0xff] %v423
  // Predicated region
  $region14: #{labert_head.1} parent=0 // pred_check
    _
  $region15: #{labert_head.1} parent=0 // pred_check_branch
    %427 = sbr.rel (0) target = $region17
  $region16: #{labert_head.1} parent=0 // pred_region
    _
  $region17: #{labert_head.1} parent=0 // pred_fallthru
    _
  // Predicated region
  $region18: #{labert_head.1} parent=0 // pred_check
    _
  $region19: #{labert_head.1} parent=0 // pred_check_branch
    %429 = sbr.rel (0) target = $region21
  $region20: #{labert_head.1} parent=0 // pred_region
    _
  $region21: #{labert_head.1} parent=0 // pred_fallthru
    _

</llo_original>
